<compile_context>
chip_gen: v6e
topology: v6e:2x2x1
jax: 0.10.0
libtpu: 0.0.40
codegen_flags: <defaults>
</compile_context>

<pallas_src>
import functools

import jax
import jax.numpy as jnp
from jax.experimental import pallas as pl
from jax.experimental.pallas import tpu as pltpu

_LN_EPS = 1e-5  # torch nn.LayerNorm default


def _round_up(a, b):
    return ((a + b - 1) // b) * b


def _round_down(a, b):
    return (a // b) * b


# --------------------------------------------------------------------------
# Kernels
# --------------------------------------------------------------------------
def _fused_kernel(x_ref, p_ref, w_ref, o_ref, *, inv_dim, eps):
    """LN1 -> Linear -> LN2 for one (TM, dimp) row tile; W resident in VMEM."""
    x = x_ref[...].astype(jnp.float32)
    g1 = p_ref[0:1, :]
    b1 = p_ref[1:2, :]
    bw = p_ref[2:3, :]
    g2 = p_ref[3:4, :]
    b2 = p_ref[4:5, :]

    # LayerNorm 1 — one-pass stats (sum, sum-of-squares), true-dim divisor.
    s1 = jnp.sum(x, axis=-1, keepdims=True)
    q1 = jnp.sum(x * x, axis=-1, keepdims=True)
    mu1 = s1 * inv_dim
    var1 = q1 * inv_dim - mu1 * mu1
    h = (x - mu1) * jax.lax.rsqrt(var1 + eps) * g1 + b1

    # Linear(dim, dim): MXU operands in the weight's native dtype, f32 accum.
    y = jnp.dot(h.astype(w_ref.dtype), w_ref[...],
                preferred_element_type=jnp.float32) + bw

    # LayerNorm 2 — one-pass stats.
    s2 = jnp.sum(y, axis=-1, keepdims=True)
    q2 = jnp.sum(y * y, axis=-1, keepdims=True)
    mu2 = s2 * inv_dim
    var2 = q2 * inv_dim - mu2 * mu2
    out = (y - mu2) * jax.lax.rsqrt(var2 + eps) * g2 + b2

    o_ref[...] = out.astype(o_ref.dtype)


def _ktiled_kernel(x_ref, p_ref, w_ref, o_ref, h_ref, acc_ref, *,
                   inv_dim, eps, nk, tk):
    """Same computation with the weight K-tiled: grid = (row tiles, K tiles).

    At k == 0: LN1 over the full (TM, dimp) x tile, staged as K-slices into a
    VMEM scratch (in the MXU dtype) + accumulator init.  Every k: one partial
    matmul into the f32 accumulator.  At k == nk-1: bias + LN2 + store.
    """
    k = pl.program_id(1)

    @pl.when(k == 0)
    def _():
        x = x_ref[...].astype(jnp.float32)
        g1 = p_ref[0:1, :]
        b1 = p_ref[1:2, :]
        s1 = jnp.sum(x, axis=-1, keepdims=True)
        q1 = jnp.sum(x * x, axis=-1, keepdims=True)
        mu1 = s1 * inv_dim
        var1 = q1 * inv_dim - mu1 * mu1
        h = ((x - mu1) * jax.lax.rsqrt(var1 + eps) * g1 + b1).astype(h_ref.dtype)
        for kk in range(nk):                      # static unroll: stage K-slices
            h_ref[kk] = h[:, kk * tk:(kk + 1) * tk]
        acc_ref[...] = jnp.zeros_like(acc_ref)

    acc_ref[...] += jnp.dot(h_ref[k], w_ref[...],
                            preferred_element_type=jnp.float32)

    @pl.when(k == nk - 1)
    def _():
        bw = p_ref[2:3, :]
        g2 = p_ref[3:4, :]
        b2 = p_ref[4:5, :]
        y = acc_ref[...] + bw
        s2 = jnp.sum(y, axis=-1, keepdims=True)
        q2 = jnp.sum(y * y, axis=-1, keepdims=True)
        mu2 = s2 * inv_dim
        var2 = q2 * inv_dim - mu2 * mu2
        out = (y - mu2) * jax.lax.rsqrt(var2 + eps) * g2 + b2
        o_ref[...] = out.astype(o_ref.dtype)


# --------------------------------------------------------------------------
# Wrapper
# --------------------------------------------------------------------------
def _vmem_budget_bytes():
    """Per-generation VMEM budget with ~25% headroom for Mosaic scratch."""
    cap = 64 * 1024 * 1024  # conservative fallback = smallest generation (v7x)
    try:
        info = pltpu.get_tpu_info()
        cap = int(getattr(info, "vmem_capacity_bytes", cap))
    except Exception:
        pass
    return max(16 * 1024 * 1024, (cap * 3) // 4)


def embeddings2(x, gamma1, beta1, w, b, gamma2, beta2, *,
                eps=_LN_EPS,
                target_tile_bytes=2 << 20,
                force_k_tiling=False,
                force_tk=None):
    """Fused LayerNorm -> Linear(dim, dim) -> LayerNorm.

    x: (..., dim).  w is stored (in, out) == torch weight.T.  Pass a bf16 `w`
    to feed the MXU in bf16 (all LayerNorm math stays in f32 either way).
    """
    *lead, dim = x.shape
    M = 1
    for d in lead:
        M *= d
    x2 = x.reshape(M, dim)

    x_item = x.dtype.itemsize
    w_item = w.dtype.itemsize
    sub = 8 if x_item >= 4 else 16      # sublane multiple for the token axis
    lane = 128

    # --- lane-dense feature axis: zero-pad dim to a 128-multiple.  LN divisors
    # use the TRUE dim; padded gamma/beta/bias/W are zero so padding stays
    # exactly zero through LN1 -> matmul -> LN2 (sliced off at the end). ---
    dimp = _round_up(dim, lane)
    if dimp != dim:
        x2 = jnp.pad(x2, ((0, 0), (0, dimp - dim)))
        w = jnp.pad(w, ((0, dimp - dim), (0, dimp - dim)))

    params = jnp.stack([gamma1, beta1, b, gamma2, beta2]).astype(jnp.float32)
    params = jnp.pad(params, ((0, 8 - params.shape[0]), (0, dimp - dim)))

    vmem_budget = _vmem_budget_bytes()

    # --- token tile: byte-targeted, sublane-rounded, >=2 grid steps so the
    # "parallel" token axis can be split across v7x's two TensorCores. ---
    tm = max(sub, _round_down(max(sub, target_tile_bytes // (dimp * x_item)), sub))
    m_sub = _round_up(M, sub)
    tm = min(tm, max(sub, _round_down(m_sub // 2, sub)))
    tm = min(tm, 1024)

    # --- path selection: resident weight vs K-tiled weight. ---
    w_resident = dimp * dimp * w_item
    use_ktiled = bool(force_k_tiling) or (w_resident > vmem_budget // 3)

    if not use_ktiled:
        def fused_vmem(tm_):
            tile = tm_ * dimp
            return (2 * 2 * tile * x_item   # double-buffered x / out tiles
                    + w_resident            # single-buffered resident weight
                    + 8 * dimp * 4          # resident parameter block
                    + 4 * tile * 4)         # f32 temporaries (x, h, y, out)
        while tm > sub and fused_vmem(tm) > vmem_budget:
            tm = max(sub, _round_down(tm // 2, sub))
        tk = dimp
    else:
        if force_tk is not None:
            tk = int(force_tk)
        else:
            tk = dimp
            while (2 * tk * dimp * w_item > vmem_budget // 3
                   and tk % 2 == 0 and (tk // 2) % 8 == 0):
                tk //= 2
        assert dimp % tk == 0 and tk % 8 == 0

        def ktiled_vmem(tm_):
            tile = tm_ * dimp
            return (2 * 2 * tile * x_item   # double-buffered x / out tiles
                    + 2 * tk * dimp * w_item  # double-buffered W K-blocks
                    + 8 * dimp * 4
                    + tile * w_item         # staged LN1 output (MXU dtype)
                    + tile * 4              # f32 accumulator
                    + 3 * tile * 4)         # f32 temporaries
        while tm > sub and ktiled_vmem(tm) > vmem_budget:
            tm = max(sub, _round_down(tm // 2, sub))

    Mp = _round_up(M, tm)
    if Mp != M:
        x2 = jnp.pad(x2, ((0, Mp - M), (0, 0)))
    grid_m = Mp // tm

    inv_dim = 1.0 / float(dim)
    out_shape = jax.ShapeDtypeStruct((Mp, dimp), x.dtype)

    def run(single_buffer_resident):
        res_kw = ({"pipeline_mode": pl.Buffered(1)}
                  if single_buffer_resident else {})
        if not use_ktiled:
            kernel = functools.partial(_fused_kernel, inv_dim=inv_dim, eps=eps)
            grid_spec = pltpu.PrefetchScalarGridSpec(
                num_scalar_prefetch=0,
                grid=(grid_m,),
                in_specs=[
                    pl.BlockSpec((tm, dimp), lambda i: (i, 0)),
                    pl.BlockSpec((8, dimp), lambda i: (0, 0), **res_kw),
                    pl.BlockSpec((dimp, dimp), lambda i: (0, 0), **res_kw),
                ],
                out_specs=pl.BlockSpec((tm, dimp), lambda i: (i, 0)),
            )
            dim_sem = ("parallel",)
            w_bytes = dimp * dimp * w_item
        else:
            nk = dimp // tk
            kernel = functools.partial(_ktiled_kernel, inv_dim=inv_dim, eps=eps,
                                       nk=nk, tk=tk)
            grid_spec = pltpu.PrefetchScalarGridSpec(
                num_scalar_prefetch=0,
                grid=(grid_m, nk),
                in_specs=[
                    pl.BlockSpec((tm, dimp), lambda i, k: (i, 0)),
                    pl.BlockSpec((8, dimp), lambda i, k: (0, 0), **res_kw),
                    pl.BlockSpec((tk, dimp), lambda i, k: (k, 0)),  # streamed
                ],
                out_specs=pl.BlockSpec((tm, dimp), lambda i, k: (i, 0)),
                scratch_shapes=[
                    pltpu.VMEM((nk, tm, tk), w.dtype),    # staged LN1 output
                    pltpu.VMEM((tm, dimp), jnp.float32),  # f32 accumulator
                ],
            )
            dim_sem = ("parallel", "arbitrary")
            w_bytes = grid_m * dimp * dimp * w_item       # W re-read per row tile

        cost = pl.CostEstimate(
            flops=2 * Mp * dimp * dimp + 10 * Mp * dimp,
            transcendentals=2 * Mp,                       # one rsqrt per row per LN
            bytes_accessed=2 * Mp * dimp * x_item + w_bytes + 8 * dimp * 4,
        )
        return pl.pallas_call(
            kernel,
            out_shape=out_shape,
            grid_spec=grid_spec,
            compiler_params=pltpu.CompilerParams(
                dimension_semantics=dim_sem,
                vmem_limit_bytes=int(vmem_budget),
            ),
            cost_estimate=cost,
        )(x2, params, w)

    try:
        out = run(True)
    except Exception:
        # pl.Buffered(1) unsupported on this jax/libtpu build: fall back to the
        # default double-buffering of the resident operands.
        out = run(False)

    out = out[:M, :dim]
    return out.reshape(*lead, dim)


def embeddings2_ref(x, gamma1, beta1, w, b, gamma2, beta2, eps=_LN_EPS):
    """Pure-JAX reference matching the torch module forward (f32 math)."""
    xf = x.astype(jnp.float32)
    mu1 = xf.mean(-1, keepdims=True)
    var1 = ((xf - mu1) ** 2).mean(-1, keepdims=True)
    h = (xf - mu1) / jnp.sqrt(var1 + eps) * gamma1 + beta1
    y = h @ w.astype(jnp.float32) + b
    mu2 = y.mean(-1, keepdims=True)
    var2 = ((y - mu2) ** 2).mean(-1, keepdims=True)
    out = (y - mu2) / jnp.sqrt(var2 + eps) * gamma2 + beta2
    return out.astype(x.dtype)


if __name__ == "__main__":
    # Shapes implied by the module: x is (batch, vis_patch_num + tab_patch_num, dim).
    batch, vis_patch_num, tab_patch_num, dim = 2, 16, 8, 32
    num_tokens = vis_patch_num + tab_patch_num  # 24

    key = jax.random.PRNGKey(0)
    kx, kg1, kb1, kw, kbw, kg2, kb2 = jax.random.split(key, 7)

    x = jax.random.normal(kx, (batch, num_tokens, dim), dtype=jnp.float32)
    gamma1 = 1.0 + 0.1 * jax.random.normal(kg1, (dim,), dtype=jnp.float32)
    beta1 = 0.1 * jax.random.normal(kb1, (dim,), dtype=jnp.float32)
    # nn.Linear(dim, dim): stored here as (in, out) = torch weight.T
    w = 0.1 * jax.random.normal(kw, (dim, dim), dtype=jnp.float32)
    b = 0.1 * jax.random.normal(kbw, (dim,), dtype=jnp.float32)
    gamma2 = 1.0 + 0.1 * jax.random.normal(kg2, (dim,), dtype=jnp.float32)
    beta2 = 0.1 * jax.random.normal(kb2, (dim,), dtype=jnp.float32)

    y_ref = embeddings2_ref(x, gamma1, beta1, w, b, gamma2, beta2)

    # 1) Default path: lane-dense padded dim, resident single-buffered weight.
    y = jax.block_until_ready(embeddings2(x, gamma1, beta1, w, b, gamma2, beta2))
    assert y.shape == x.shape
    err = float(jnp.max(jnp.abs(y - y_ref)))
    assert jnp.allclose(y, y_ref, atol=1e-4, rtol=1e-4), err

    # 2) K-tiled weight path (forced here at toy scale; selected automatically
    #    when the resident weight would overflow the per-generation VMEM budget).
    y_kt = jax.block_until_ready(
        embeddings2(x, gamma1, beta1, w, b, gamma2, beta2,
                    force_k_tiling=True, force_tk=64))
    err_kt = float(jnp.max(jnp.abs(y_kt - y_ref)))
    assert jnp.allclose(y_kt, y_ref, atol=1e-4, rtol=1e-4), err_kt

    # 3) bf16 weight -> bf16 MXU operands (LayerNorm math stays f32).
    y_bf = jax.block_until_ready(
        embeddings2(x, gamma1, beta1, w.astype(jnp.bfloat16), b, gamma2, beta2))
    err_bf = float(jnp.max(jnp.abs(y_bf.astype(jnp.float32) - y_ref)))
    assert err_bf < 5e-2, err_bf

    print("KERNEL_OK")
</pallas_src>

<mosaic_0001>
module attributes {stable_mosaic.version = 11 : i64} {
  func.func @_fused_kernel(%arg0: i32, %arg1: memref<24x128xf32, #tpu.memory_space<vmem>>, %arg2: memref<8x128xf32, #tpu.memory_space<vmem>>, %arg3: memref<128x128xf32, #tpu.memory_space<vmem>>, %arg4: memref<24x128xf32, #tpu.memory_space<vmem>>) attributes {dimension_semantics = [#tpu.dimension_semantics<parallel>], iteration_bounds = array<i64: 2>, scalar_prefetch = 0 : i64, scratch_operands = 0 : i64, tpu.core_type = #tpu.core_type<tc>, window_params = [{transform_indices = @transform_0, window_bounds = array<i64: 24, 128>}, {pipeline_mode = #tpu.pipeline_mode<synchronous>, transform_indices = @transform_1, window_bounds = array<i64: 8, 128>}, {pipeline_mode = #tpu.pipeline_mode<synchronous>, transform_indices = @transform_2, window_bounds = array<i64: 128, 128>}, {transform_indices = @transform_3, window_bounds = array<i64: 24, 128>}]} {
    %c0 = arith.constant 0 : index
    %c0_0 = arith.constant 0 : index
    %0 = vector.load %arg1[%c0, %c0_0] : memref<24x128xf32, #tpu.memory_space<vmem>>, vector<24x128xf32>
    %c0_1 = arith.constant 0 : index
    %c0_2 = arith.constant 0 : index
    %1 = vector.load %arg2[%c0_1, %c0_2] : memref<8x128xf32, #tpu.memory_space<vmem>>, vector<1x128xf32>
    %c1 = arith.constant 1 : index
    %c0_3 = arith.constant 0 : index
    %2 = vector.load %arg2[%c1, %c0_3] : memref<8x128xf32, #tpu.memory_space<vmem>>, vector<1x128xf32>
    %c2 = arith.constant 2 : index
    %c0_4 = arith.constant 0 : index
    %3 = vector.load %arg2[%c2, %c0_4] : memref<8x128xf32, #tpu.memory_space<vmem>>, vector<1x128xf32>
    %c3 = arith.constant 3 : index
    %c0_5 = arith.constant 0 : index
    %4 = vector.load %arg2[%c3, %c0_5] : memref<8x128xf32, #tpu.memory_space<vmem>>, vector<1x128xf32>
    %c4 = arith.constant 4 : index
    %c0_6 = arith.constant 0 : index
    %5 = vector.load %arg2[%c4, %c0_6] : memref<8x128xf32, #tpu.memory_space<vmem>>, vector<1x128xf32>
    %cst = arith.constant dense<0.000000e+00> : vector<24xf32>
    %6 = vector.multi_reduction <add>, %0, %cst [1] : vector<24x128xf32> to vector<24xf32>
    %7 = vector.shape_cast %6 : vector<24xf32> to vector<24x1xf32>
    %8 = arith.mulf %0, %0 : vector<24x128xf32>
    %cst_7 = arith.constant dense<0.000000e+00> : vector<24xf32>
    %9 = vector.multi_reduction <add>, %8, %cst_7 [1] : vector<24x128xf32> to vector<24xf32>
    %10 = vector.shape_cast %9 : vector<24xf32> to vector<24x1xf32>
    %cst_8 = arith.constant 3.125000e-02 : f32
    %11 = vector.broadcast %cst_8 : f32 to vector<24x1xf32>
    %12 = arith.mulf %7, %11 : vector<24x1xf32>
    %cst_9 = arith.constant 3.125000e-02 : f32
    %13 = vector.broadcast %cst_9 : f32 to vector<24x1xf32>
    %14 = arith.mulf %10, %13 : vector<24x1xf32>
    %15 = arith.mulf %12, %12 : vector<24x1xf32>
    %16 = arith.subf %14, %15 : vector<24x1xf32>
    %17 = vector.broadcast %12 : vector<24x1xf32> to vector<24x128xf32>
    %18 = arith.subf %0, %17 : vector<24x128xf32>
    %cst_10 = arith.constant 9.99999974E-6 : f32
    %19 = vector.broadcast %cst_10 : f32 to vector<24x1xf32>
    %20 = arith.addf %16, %19 : vector<24x1xf32>
    %21 = math.rsqrt %20 : vector<24x1xf32>
    %22 = vector.broadcast %21 : vector<24x1xf32> to vector<24x128xf32>
    %23 = arith.mulf %18, %22 : vector<24x128xf32>
    %24 = vector.broadcast %1 : vector<1x128xf32> to vector<24x128xf32>
    %25 = arith.mulf %23, %24 : vector<24x128xf32>
    %26 = vector.broadcast %2 : vector<1x128xf32> to vector<24x128xf32>
    %27 = arith.addf %25, %26 : vector<24x128xf32>
    %c0_11 = arith.constant 0 : index
    %c0_12 = arith.constant 0 : index
    %28 = vector.load %arg3[%c0_11, %c0_12] : memref<128x128xf32, #tpu.memory_space<vmem>>, vector<128x128xf32>
    %cst_13 = arith.constant dense<0.000000e+00> : vector<24x128xf32>
    %29 = tpu.matmul %27, %28, %cst_13 {dimension_numbers = #tpu.dot_dimension_numbers<[1], [0], [0], [1], [0, 0, 1, 1], [], []>} : vector<24x128xf32>, vector<128x128xf32>, vector<24x128xf32> -> vector<24x128xf32>
    %30 = vector.broadcast %3 : vector<1x128xf32> to vector<24x128xf32>
    %31 = arith.addf %29, %30 : vector<24x128xf32>
    %cst_14 = arith.constant dense<0.000000e+00> : vector<24xf32>
    %32 = vector.multi_reduction <add>, %31, %cst_14 [1] : vector<24x128xf32> to vector<24xf32>
    %33 = vector.shape_cast %32 : vector<24xf32> to vector<24x1xf32>
    %34 = arith.mulf %31, %31 : vector<24x128xf32>
    %cst_15 = arith.constant dense<0.000000e+00> : vector<24xf32>
    %35 = vector.multi_reduction <add>, %34, %cst_15 [1] : vector<24x128xf32> to vector<24xf32>
    %36 = vector.shape_cast %35 : vector<24xf32> to vector<24x1xf32>
    %cst_16 = arith.constant 3.125000e-02 : f32
    %37 = vector.broadcast %cst_16 : f32 to vector<24x1xf32>
    %38 = arith.mulf %33, %37 : vector<24x1xf32>
    %cst_17 = arith.constant 3.125000e-02 : f32
    %39 = vector.broadcast %cst_17 : f32 to vector<24x1xf32>
    %40 = arith.mulf %36, %39 : vector<24x1xf32>
    %41 = arith.mulf %38, %38 : vector<24x1xf32>
    %42 = arith.subf %40, %41 : vector<24x1xf32>
    %43 = vector.broadcast %38 : vector<24x1xf32> to vector<24x128xf32>
    %44 = arith.subf %31, %43 : vector<24x128xf32>
    %cst_18 = arith.constant 9.99999974E-6 : f32
    %45 = vector.broadcast %cst_18 : f32 to vector<24x1xf32>
    %46 = arith.addf %42, %45 : vector<24x1xf32>
    %47 = math.rsqrt %46 : vector<24x1xf32>
    %48 = vector.broadcast %47 : vector<24x1xf32> to vector<24x128xf32>
    %49 = arith.mulf %44, %48 : vector<24x128xf32>
    %50 = vector.broadcast %4 : vector<1x128xf32> to vector<24x128xf32>
    %51 = arith.mulf %49, %50 : vector<24x128xf32>
    %52 = vector.broadcast %5 : vector<1x128xf32> to vector<24x128xf32>
    %53 = arith.addf %51, %52 : vector<24x128xf32>
    %c0_19 = arith.constant 0 : index
    %c0_20 = arith.constant 0 : index
    %54 = vector.load %arg4[%c0_19, %c0_20] : memref<24x128xf32, #tpu.memory_space<vmem>>, vector<24x128xf32>
    tpu.vector_store %arg4[%c0_19, %c0_20], %53 {strides = array<i32>} : memref<24x128xf32, #tpu.memory_space<vmem>>, vector<24x128xf32>,
    return
  }
  func.func @transform_0(%arg0: i32) -> (i32, i32) {
    %c0_i32 = arith.constant 0 : i32
    %c0_i32_0 = arith.constant 0 : i32
    return %arg0, %c0_i32 : i32, i32
  }
  func.func @transform_1(%arg0: i32) -> (i32, i32) {
    %c0_i32 = arith.constant 0 : i32
    %c0_i32_0 = arith.constant 0 : i32
    %c0_i32_1 = arith.constant 0 : i32
    return %c0_i32, %c0_i32_0 : i32, i32
  }
  func.func @transform_2(%arg0: i32) -> (i32, i32) {
    %c0_i32 = arith.constant 0 : i32
    %c0_i32_0 = arith.constant 0 : i32
    %c0_i32_1 = arith.constant 0 : i32
    return %c0_i32, %c0_i32_0 : i32, i32
  }
  func.func @transform_3(%arg0: i32) -> (i32, i32) {
    %c0_i32 = arith.constant 0 : i32
    %c0_i32_0 = arith.constant 0 : i32
    return %arg0, %c0_i32 : i32, i32
  }
}

module attributes {stable_mosaic.version = 11 : i64} {
  func.func @_fused_kernel(%arg0: i32, %arg1: memref<24x128xf32, #tpu.memory_space<vmem>>, %arg2: memref<8x128xf32, #tpu.memory_space<vmem>>, %arg3: memref<128x128xf32, #tpu.memory_space<vmem>>, %arg4: memref<24x128xf32, #tpu.memory_space<vmem>>) attributes {dimension_semantics = [#tpu.dimension_semantics<parallel>], iteration_bounds = array<i64: 2>, scalar_prefetch = 0 : i64, scratch_operands = 0 : i64, tpu.core_type = #tpu.core_type<tc>, window_params = [{transform_indices = @transform_0, window_bounds = array<i64: 24, 128>}, {pipeline_mode = #tpu.pipeline_mode<synchronous>, transform_indices = @transform_1, window_bounds = array<i64: 8, 128>}, {pipeline_mode = #tpu.pipeline_mode<synchronous>, transform_indices = @transform_2, window_bounds = array<i64: 128, 128>}, {transform_indices = @transform_3, window_bounds = array<i64: 24, 128>}]} {
    %c0 = arith.constant 0 : index
    %c0_0 = arith.constant 0 : index
    %0 = vector.load %arg1[%c0, %c0_0] : memref<24x128xf32, #tpu.memory_space<vmem>>, vector<24x128xf32>
    %c0_1 = arith.constant 0 : index
    %c0_2 = arith.constant 0 : index
    %1 = vector.load %arg2[%c0_1, %c0_2] : memref<8x128xf32, #tpu.memory_space<vmem>>, vector<1x128xf32>
    %c1 = arith.constant 1 : index
    %c0_3 = arith.constant 0 : index
    %2 = vector.load %arg2[%c1, %c0_3] : memref<8x128xf32, #tpu.memory_space<vmem>>, vector<1x128xf32>
    %c2 = arith.constant 2 : index
    %c0_4 = arith.constant 0 : index
    %3 = vector.load %arg2[%c2, %c0_4] : memref<8x128xf32, #tpu.memory_space<vmem>>, vector<1x128xf32>
    %c3 = arith.constant 3 : index
    %c0_5 = arith.constant 0 : index
    %4 = vector.load %arg2[%c3, %c0_5] : memref<8x128xf32, #tpu.memory_space<vmem>>, vector<1x128xf32>
    %c4 = arith.constant 4 : index
    %c0_6 = arith.constant 0 : index
    %5 = vector.load %arg2[%c4, %c0_6] : memref<8x128xf32, #tpu.memory_space<vmem>>, vector<1x128xf32>
    %cst = arith.constant dense<0.000000e+00> : vector<24xf32>
    %6 = vector.multi_reduction <add>, %0, %cst [1] : vector<24x128xf32> to vector<24xf32>
    %7 = vector.shape_cast %6 : vector<24xf32> to vector<24x1xf32>
    %8 = arith.mulf %0, %0 : vector<24x128xf32>
    %cst_7 = arith.constant dense<0.000000e+00> : vector<24xf32>
    %9 = vector.multi_reduction <add>, %8, %cst_7 [1] : vector<24x128xf32> to vector<24xf32>
    %10 = vector.shape_cast %9 : vector<24xf32> to vector<24x1xf32>
    %cst_8 = arith.constant 3.125000e-02 : f32
    %11 = vector.broadcast %cst_8 : f32 to vector<24x1xf32>
    %12 = arith.mulf %7, %11 : vector<24x1xf32>
    %cst_9 = arith.constant 3.125000e-02 : f32
    %13 = vector.broadcast %cst_9 : f32 to vector<24x1xf32>
    %14 = arith.mulf %10, %13 : vector<24x1xf32>
    %15 = arith.mulf %12, %12 : vector<24x1xf32>
    %16 = arith.subf %14, %15 : vector<24x1xf32>
    %17 = vector.broadcast %12 : vector<24x1xf32> to vector<24x128xf32>
    %18 = arith.subf %0, %17 : vector<24x128xf32>
    %cst_10 = arith.constant 9.99999974E-6 : f32
    %19 = vector.broadcast %cst_10 : f32 to vector<24x1xf32>
    %20 = arith.addf %16, %19 : vector<24x1xf32>
    %21 = math.rsqrt %20 : vector<24x1xf32>
    %22 = vector.broadcast %21 : vector<24x1xf32> to vector<24x128xf32>
    %23 = arith.mulf %18, %22 : vector<24x128xf32>
    %24 = vector.broadcast %1 : vector<1x128xf32> to vector<24x128xf32>
    %25 = arith.mulf %23, %24 : vector<24x128xf32>
    %26 = vector.broadcast %2 : vector<1x128xf32> to vector<24x128xf32>
    %27 = arith.addf %25, %26 : vector<24x128xf32>
    %c0_11 = arith.constant 0 : index
    %c0_12 = arith.constant 0 : index
    %28 = vector.load %arg3[%c0_11, %c0_12] : memref<128x128xf32, #tpu.memory_space<vmem>>, vector<128x128xf32>
    %cst_13 = arith.constant dense<0.000000e+00> : vector<24x128xf32>
    %29 = tpu.matmul %27, %28, %cst_13 {dimension_numbers = #tpu.dot_dimension_numbers<[1], [0], [0], [1], [0, 0, 1, 1], [], []>} : vector<24x128xf32>, vector<128x128xf32>, vector<24x128xf32> -> vector<24x128xf32>
    %30 = vector.broadcast %3 : vector<1x128xf32> to vector<24x128xf32>
    %31 = arith.addf %29, %30 : vector<24x128xf32>
    %cst_14 = arith.constant dense<0.000000e+00> : vector<24xf32>
    %32 = vector.multi_reduction <add>, %31, %cst_14 [1] : vector<24x128xf32> to vector<24xf32>
    %33 = vector.shape_cast %32 : vector<24xf32> to vector<24x1xf32>
    %34 = arith.mulf %31, %31 : vector<24x128xf32>
    %cst_15 = arith.constant dense<0.000000e+00> : vector<24xf32>
    %35 = vector.multi_reduction <add>, %34, %cst_15 [1] : vector<24x128xf32> to vector<24xf32>
    %36 = vector.shape_cast %35 : vector<24xf32> to vector<24x1xf32>
    %cst_16 = arith.constant 3.125000e-02 : f32
    %37 = vector.broadcast %cst_16 : f32 to vector<24x1xf32>
    %38 = arith.mulf %33, %37 : vector<24x1xf32>
    %cst_17 = arith.constant 3.125000e-02 : f32
    %39 = vector.broadcast %cst_17 : f32 to vector<24x1xf32>
    %40 = arith.mulf %36, %39 : vector<24x1xf32>
    %41 = arith.mulf %38, %38 : vector<24x1xf32>
    %42 = arith.subf %40, %41 : vector<24x1xf32>
    %43 = vector.broadcast %38 : vector<24x1xf32> to vector<24x128xf32>
    %44 = arith.subf %31, %43 : vector<24x128xf32>
    %cst_18 = arith.constant 9.99999974E-6 : f32
    %45 = vector.broadcast %cst_18 : f32 to vector<24x1xf32>
    %46 = arith.addf %42, %45 : vector<24x1xf32>
    %47 = math.rsqrt %46 : vector<24x1xf32>
    %48 = vector.broadcast %47 : vector<24x1xf32> to vector<24x128xf32>
    %49 = arith.mulf %44, %48 : vector<24x128xf32>
    %50 = vector.broadcast %4 : vector<1x128xf32> to vector<24x128xf32>
    %51 = arith.mulf %49, %50 : vector<24x128xf32>
    %52 = vector.broadcast %5 : vector<1x128xf32> to vector<24x128xf32>
    %53 = arith.addf %51, %52 : vector<24x128xf32>
    %c0_19 = arith.constant 0 : index
    %c0_20 = arith.constant 0 : index
    %54 = vector.load %arg4[%c0_19, %c0_20] : memref<24x128xf32, #tpu.memory_space<vmem>>, vector<24x128xf32>
    tpu.vector_store %arg4[%c0_19, %c0_20], %53 {strides = array<i32>} : memref<24x128xf32, #tpu.memory_space<vmem>>, vector<24x128xf32>,
    return
  }
  func.func @transform_0(%arg0: i32) -> (i32, i32) {
    %c0_i32 = arith.constant 0 : i32
    %c0_i32_0 = arith.constant 0 : i32
    return %arg0, %c0_i32 : i32, i32
  }
  func.func @transform_1(%arg0: i32) -> (i32, i32) {
    %c0_i32 = arith.constant 0 : i32
    %c0_i32_0 = arith.constant 0 : i32
    %c0_i32_1 = arith.constant 0 : i32
    return %c0_i32, %c0_i32_0 : i32, i32
  }
  func.func @transform_2(%arg0: i32) -> (i32, i32) {
    %c0_i32 = arith.constant 0 : i32
    %c0_i32_0 = arith.constant 0 : i32
    %c0_i32_1 = arith.constant 0 : i32
    return %c0_i32, %c0_i32_0 : i32, i32
  }
  func.func @transform_3(%arg0: i32) -> (i32, i32) {
    %c0_i32 = arith.constant 0 : i32
    %c0_i32_0 = arith.constant 0 : i32
    return %arg0, %c0_i32 : i32, i32
  }
}

</mosaic_0001>

<llo_original>
// kernel: tpu_custom_call.1
$region0: #{tpu_custom_call.1}
  #allocation0 [shape = 'u32[]', space=smem, size = 0x4, offset = 0x4, fixed_abs, tag = 'smem constant byte address 0x4 - core index']
  #allocation1 [shape = 'u32[144,128]{1,0:T(1,128)}', space=vmem, size = 0x12000, scoped, tag = 'internal scratch']
  %s0 = inlined_call_operand.hbm [shape: f32[48,128], index: 0, kind: input, shape index: {}]
  %s1 = inlined_call_operand.hbm [shape: f32[8,128], index: 1, kind: input, shape index: {}]
  %s2 = inlined_call_operand.hbm [shape: f32[128,128], index: 2, kind: input, shape index: {}]
  %s3 = inlined_call_operand.hbm [shape: f32[48,128], index: 3, kind: output, shape index: {}]
  %s4 = sld [smem:[#allocation0]]
  $region57: #{tpu_custom_call.1} parent=0
    _
  %s6 = ssub.s32 1, %s4
  %s7 = scalar_select 0, %s6, %s4
  $region1: #{tpu_custom_call.1} parent=0
    #allocation2 [shape = 'u8[24576]{0}', space=vmem, size = 0x6000, scoped, tag = 'input window, operand 0']
    #allocation3 [shape = 's32[2]{0}', space=sflag, size = 0x8, scoped, tag = 'scoped memory for tpu_custom_call.1']
    #allocation4 [shape = 's32[2]{0}', space=sflag, size = 0x8, scoped, tag = 'scoped memory for tpu_custom_call.1']
    #allocation5 [shape = 'u8[4096]{0}', space=vmem, size = 0x1000, scoped, tag = 'input window, operand 1, single buffered']
    #allocation6 [shape = 's32[1]{0}', space=sflag, size = 0x4, scoped, tag = 'scoped memory for tpu_custom_call.1']
    #allocation7 [shape = 'u8[65536]{0}', space=vmem, size = 0x10000, scoped, tag = 'input window, operand 2, single buffered']
    #allocation8 [shape = 'u8[24576]{0}', space=vmem, size = 0x6000, scoped, tag = 'output window, operand 0']
    %8 = vsyncpa [#allocation3], 0
    %s9 = scalar_lea.sflag [#allocation3], 1
    %10 = vsyncpa %s9, 0
    %11 = vsyncpa [#allocation6], 0
    %12 = vsyncpa [#allocation4], 0
    %s13 = scalar_lea.sflag [#allocation4], 1
    %14 = vsyncpa %s13, 0
    loop: start=0, step=1, limit=4
    $region2: #{tpu_custom_call.1} parent=1 // loop_pre_header
      _
    $region3: #{tpu_custom_call.1} parent=1 // loop_header
      %s16 = sphi 0, %s20
      %p17 = scmp.ge.s32.totalorder %s16, 4
      %s26 = sphi 0, %s28
      %s29 = sphi 0, %s26
      %s30 = sphi 0, %s29
      %s46 = sphi 0, %s30
      %s50 = sphi 0, %s50
      %s52 = sphi 0, %s50
      %s53 = sphi 0, %s52
      %s67 = sphi 0, %s53
      %s71 = sphi 0, %s71
      %s73 = sphi 0, %s71
      %s74 = sphi 0, %s73
      %s88 = sphi 0, %s74
      %s94 = sphi 0, %s96
      %s97 = sphi 0, %s94
      %s98 = sphi 0, %s97
      %s114 = sphi 0, %s98
    $region4: #{tpu_custom_call.1} parent=1 // loop_header_branch
      %19 = sbr.rel (%p17) target = $region8
    $region5: #{tpu_custom_call.1} parent=1 // loop_body
      %s21 = ssub.s32 %s16, 1
      %s22 = ssub.s32 %s16, 2
      %s23 = sadd.s32 %s16, 1
      %s24 = ssub.s32 %s16, %s23
      %p25 = scmp.eq.s32.totalorder %s24, 0
      %s27 = sadd.s32 %s26, 1
      %s28 = scalar_select %p25, %s26, %s27
      %p31 = pneg %p25
      %p32 = scmp.eq.s32.totalorder %s16, 1
      %p33 = por %p31, %p32
      %p34 = scmp.ne.s32.totalorder %s26, %s29
      %p35 = scmp.eq.s32.totalorder %s16, 0
      %p36 = por %p34, %p35
      %p37 = scmp.ne.s32.totalorder %s26, %s29
      %p38 = scmp.eq.s32.totalorder %s21, 1
      %p39 = por %p37, %p38
      %p40 = scmp.ne.s32.totalorder %s29, %s30
      %p41 = scmp.eq.s32.totalorder %s21, 0
      %p42 = por %p40, %p41
      %p43 = scmp.ne.s32.totalorder %s29, %s30
      %p44 = scmp.eq.s32.totalorder %s22, 1
      %p45 = por %p43, %p44
      %p47 = scmp.ne.s32.totalorder %s30, %s46
      %p48 = scmp.eq.s32.totalorder %s22, 0
      %p49 = por %p47, %p48
      %s51 = sadd.s32 %s50, 1
      %p54 = scmp.eq.s32.totalorder %s16, 1
      %p55 = scmp.ne.s32.totalorder %s50, %s52
      %p56 = scmp.eq.s32.totalorder %s16, 0
      %p57 = por %p55, %p56
      %p58 = scmp.ne.s32.totalorder %s50, %s52
      %p59 = scmp.eq.s32.totalorder %s21, 1
      %p60 = por %p58, %p59
      %p61 = scmp.ne.s32.totalorder %s52, %s53
      %p62 = scmp.eq.s32.totalorder %s21, 0
      %p63 = por %p61, %p62
      %p64 = scmp.ne.s32.totalorder %s52, %s53
      %p65 = scmp.eq.s32.totalorder %s22, 1
      %p66 = por %p64, %p65
      %p68 = scmp.ne.s32.totalorder %s53, %s67
      %p69 = scmp.eq.s32.totalorder %s22, 0
      %p70 = por %p68, %p69
      %s72 = sadd.s32 %s71, 1
      %p75 = scmp.eq.s32.totalorder %s16, 1
      %p76 = scmp.ne.s32.totalorder %s71, %s73
      %p77 = scmp.eq.s32.totalorder %s16, 0
      %p78 = por %p76, %p77
      %p79 = scmp.ne.s32.totalorder %s71, %s73
      %p80 = scmp.eq.s32.totalorder %s21, 1
      %p81 = por %p79, %p80
      %p82 = scmp.ne.s32.totalorder %s73, %s74
      %p83 = scmp.eq.s32.totalorder %s21, 0
      %p84 = por %p82, %p83
      %p85 = scmp.ne.s32.totalorder %s73, %s74
      %p86 = scmp.eq.s32.totalorder %s22, 1
      %p87 = por %p85, %p86
      %p89 = scmp.ne.s32.totalorder %s74, %s88
      %p90 = scmp.eq.s32.totalorder %s22, 0
      %p91 = por %p89, %p90
      %s92 = ssub.s32 %s16, %s23
      %p93 = scmp.eq.s32.totalorder %s92, 0
      %s95 = sadd.s32 %s94, 1
      %s96 = scalar_select %p93, %s94, %s95
      %p99 = pneg %p93
      %p100 = scmp.eq.s32.totalorder %s16, 1
      %p101 = por %p99, %p100
      %p102 = scmp.ne.s32.totalorder %s94, %s97
      %p103 = scmp.eq.s32.totalorder %s16, 0
      %p104 = por %p102, %p103
      %p105 = scmp.ne.s32.totalorder %s94, %s97
      %p106 = scmp.eq.s32.totalorder %s21, 1
      %p107 = por %p105, %p106
      %p108 = scmp.ne.s32.totalorder %s97, %s98
      %p109 = scmp.eq.s32.totalorder %s21, 0
      %p110 = por %p108, %p109
      %p111 = scmp.ne.s32.totalorder %s97, %s98
      %p112 = scmp.eq.s32.totalorder %s22, 1
      %p113 = por %p111, %p112
      %p115 = scmp.ne.s32.totalorder %s98, %s114
      %p116 = scmp.eq.s32.totalorder %s22, 0
      %p117 = por %p115, %p116
      %p118 = scmp.le.s32.totalorder 1, %s16
      %p119 = scmp.lt.s32.totalorder %s16, 3
      %p120 = pnand %p118, %p119
      %p121 = pneg %p120
      // Predicated region
      $region9: #{tpu_custom_call.1} parent=5 // pred_check
        _
      $region10: #{tpu_custom_call.1} parent=5 // pred_check_branch
        %123 = sbr.rel (%p120) target = $region12
      $region11: #{tpu_custom_call.1} parent=5 // pred_region
        %s124 = ssub.s32 %s16, 1
        // Predicated region
        $region13: #{tpu_custom_call.1} parent=11 // pred_check
          %p125 = pneg %p63
        $region14: #{tpu_custom_call.1} parent=11 // pred_check_branch
          %127 = sbr.rel (%p125) target = $region16
        $region15: #{tpu_custom_call.1} parent=11 // pred_region
          %s129 = ssub.s32 128, 128
          %130 = vsyncadd [#allocation6], %s129
          %s132 = sshll.u32 [#allocation5], 4
          %s133 = int_to_ptr.vmem [resolvable:$true] %s132
          %135 = dma.hbm_to_vmem [thread:$0]  %s1, 128, %s133, [#allocation6]
        $region16: #{tpu_custom_call.1} parent=11 // pred_fallthru
          _
        // Predicated region
        $region17: #{tpu_custom_call.1} parent=11 // pred_check
          %p136 = pneg %p84
        $region18: #{tpu_custom_call.1} parent=11 // pred_check_branch
          %138 = sbr.rel (%p136) target = $region20
        $region19: #{tpu_custom_call.1} parent=11 // pred_region
          %s140 = ssub.s32 2048, 2048
          %141 = vsyncadd [#allocation6], %s140
          %s142 = sshll.u32 [#allocation7], 4
          %s143 = int_to_ptr.vmem [resolvable:$true] %s142
          %148 = dma.hbm_to_vmem [thread:$0]  %s2, 2048, %s143, [#allocation6], 128, 128, 8
        $region20: #{tpu_custom_call.1} parent=11 // pred_fallthru
          _
      $region12: #{tpu_custom_call.1} parent=5 // pred_fallthru
        _
      %p149 = scmp.lt.s32.totalorder %s16, 2
      // Predicated region
      $region21: #{tpu_custom_call.1} parent=5 // pred_check
        %p150 = pneg %p149
      $region22: #{tpu_custom_call.1} parent=5 // pred_check_branch
        %152 = sbr.rel (%p150) target = $region24
      $region23: #{tpu_custom_call.1} parent=5 // pred_region
        // Predicated region
        $region25: #{tpu_custom_call.1} parent=23 // pred_check
          %p153 = pneg %p36
        $region26: #{tpu_custom_call.1} parent=23 // pred_check_branch
          %155 = sbr.rel (%p153) target = $region28
        $region27: #{tpu_custom_call.1} parent=23 // pred_region
          %s156 = sand.u32 %s26, 1
          %s157 = scalar_lea.sflag [#allocation3], %s156
          %s158 = sand.u32 %s26, 1
          %s159 = smul.addr %s158, 24
          %s160 = scalar_lea.vmem [#allocation2], %s159
          %s161 = smul.u32 3, %s16
          %s163 = ssub.s32 384, 384
          %164 = vsyncadd %s157, %s163
          %s165 = smul.addr %s161, 128
          %s166 = scalar_lea.hbm %s0, %s165
          %s167 = sshll.u32 %s160, 4
          %s168 = int_to_ptr.vmem [resolvable:$true] %s167
          %173 = dma.hbm_to_vmem [thread:$0]  %s166, 384, %s168, %s157, 128, 128, 8
        $region28: #{tpu_custom_call.1} parent=23 // pred_fallthru
          _
      $region24: #{tpu_custom_call.1} parent=5 // pred_fallthru
        _
      %p174 = scmp.le.s32.totalorder 1, %s16
      %p175 = scmp.lt.s32.totalorder %s16, 3
      %p176 = pnand %p174, %p175
      %p177 = pneg %p176
      // Predicated region
      $region29: #{tpu_custom_call.1} parent=5 // pred_check
        _
      $region30: #{tpu_custom_call.1} parent=5 // pred_check_branch
        %179 = sbr.rel (%p176) target = $region32
      $region31: #{tpu_custom_call.1} parent=5 // pred_region
        %s180 = ssub.s32 %s16, 1
        %s181 = sand.u32 %s29, 1
        %s182 = scalar_lea.sflag [#allocation3], %s181
        %s183 = sand.u32 %s29, 1
        %s184 = smul.addr %s183, 24
        %s185 = scalar_lea.vmem [#allocation2], %s184
        // Predicated region
        $region33: #{tpu_custom_call.1} parent=31 // pred_check
          %p186 = pneg %p42
        $region34: #{tpu_custom_call.1} parent=31 // pred_check_branch
          %188 = sbr.rel (%p186) target = $region36
        $region35: #{tpu_custom_call.1} parent=31 // pred_region
          %189 = dma.done %s182, 384
        $region36: #{tpu_custom_call.1} parent=31 // pred_fallthru
          _
        // Predicated region
        $region37: #{tpu_custom_call.1} parent=31 // pred_check
          %p190 = pneg %p63
        $region38: #{tpu_custom_call.1} parent=31 // pred_check_branch
          %192 = sbr.rel (%p190) target = $region40
        $region39: #{tpu_custom_call.1} parent=31 // pred_region
          %193 = dma.done [#allocation6], 128
        $region40: #{tpu_custom_call.1} parent=31 // pred_fallthru
          _
        // Predicated region
        $region41: #{tpu_custom_call.1} parent=31 // pred_check
          %p194 = pneg %p84
        $region42: #{tpu_custom_call.1} parent=31 // pred_check_branch
          %196 = sbr.rel (%p194) target = $region44
        $region43: #{tpu_custom_call.1} parent=31 // pred_region
          %197 = dma.done [#allocation6], 2048
        $region44: #{tpu_custom_call.1} parent=31 // pred_fallthru
          _
        %s198 = sand.u32 %s29, 1
        %s199 = scalar_lea.sflag [#allocation3], %s198
        %s200 = sand.u32 %s29, 1
        %s201 = smul.addr %s200, 24
        %s202 = scalar_lea.vmem [#allocation2], %s201
        %p203 = pneg %p42
        %p204 = pneg %p39
        %p205 = pneg %p63
        %p206 = pneg %p60
        %p207 = pneg %p84
        %p208 = pneg %p81
        %p209 = pneg %p110
        %p210 = pneg %p107
        %s211 = sand.u32 %s97, 1
        %s212 = scalar_lea.sflag [#allocation4], %s211
        %s213 = sand.u32 %s97, 1
        %s214 = smul.addr %s213, 24
        %s215 = scalar_lea.vmem [#allocation8], %s214
        %s216 = smul.u32 3, %s21
        %s217 = smul.u32 3, %s21
        %v218 = vld [vmem:[%s185] sm:$0xff]
        %v219 = vld [vmem:[%s185 + $0x8] sm:$0xff]
        %v220 = vld [vmem:[%s185 + $0x10] sm:$0xff]
        %v221 = vld [vmem:[#allocation5] sm:$0x1]
        %v222 = vld [vmem:[#allocation5 + $0x1] sm:$0x1]
        %v223 = vld [vmem:[#allocation5 + $0x2] sm:$0x1]
        %v224 = vld [vmem:[#allocation5 + $0x3] sm:$0x1]
        %v225 = vld [vmem:[#allocation5 + $0x4] sm:$0x1]
        %226 = vadd.xlane.f32.xlu0 %v218
        %v227 = vpop.xlane.xlu0 %226
        %228 = vadd.xlane.f32.xlu0 %v219
        %v229 = vpop.xlane.xlu0 %228
        %230 = vadd.xlane.f32.xlu0 %v220
        %v231 = vpop.xlane.xlu0 %230
        %v232 = vmul.f32 %v218, %v218
        %v233 = vmul.f32 %v219, %v219
        %v234 = vmul.f32 %v220, %v220
        %235 = vadd.xlane.f32.xlu0 %v232
        %v236 = vpop.xlane.xlu0 %235
        %237 = vadd.xlane.f32.xlu0 %v233
        %v238 = vpop.xlane.xlu0 %237
        %239 = vadd.xlane.f32.xlu0 %v234
        %v240 = vpop.xlane.xlu0 %239
        %v241 = vmul.f32 %v227, 0.03125
        %v242 = vmul.f32 %v229, 0.03125
        %v243 = vmul.f32 %v231, 0.03125
        %v244 = vmul.f32 %v236, 0.03125
        %v245 = vmul.f32 %v238, 0.03125
        %v246 = vmul.f32 %v240, 0.03125
        %v247 = vmul.f32 %v241, %v241
        %v248 = vmul.f32 %v242, %v242
        %v249 = vmul.f32 %v243, %v243
        %v250 = vsub.f32 %v244, %v247
        %v251 = vsub.f32 %v245, %v248
        %v252 = vsub.f32 %v246, %v249
        %v253 = vsub.f32 %v218, %v241
        %v254 = vsub.f32 %v219, %v242
        %v255 = vsub.f32 %v220, %v243
        %v256 = vadd.f32 %v250, 1e-05
        %v257 = vadd.f32 %v251, 1e-05
        %v258 = vadd.f32 %v252, 1e-05
        %v259 = vrsqrt.pop %v256
        %v260 = vrsqrt.pop %v257
        %v261 = vrsqrt.pop %v258
        %v262 = vmul.f32 %v253, %v259
        %v263 = vmul.f32 %v254, %v260
        %v264 = vmul.f32 %v255, %v261
        %v265 = vlaneseq
        %v266 = vshrl.u32 %v265, 7
        %v267 = vsub.s32 0, %v266
        %v268 = vrot.slane %v221, %v267
        %v269 = vmul.f32 %v262, %v268
        %v270 = vmul.f32 %v263, %v268
        %v271 = vmul.f32 %v264, %v268
        %v272 = vlaneseq
        %v273 = vshrl.u32 %v272, 7
        %v274 = vsub.s32 0, %v273
        %v275 = vrot.slane %v222, %v274
        %v276 = vadd.f32 %v269, %v275
        %v277 = vadd.f32 %v270, %v275
        %v278 = vadd.f32 %v271, %v275
        %v279 = vld [vmem:[#allocation7] sm:$0xff]
        %v280 = vld [vmem:[#allocation7 + $0x8] sm:$0xff]
        %v281 = vld [vmem:[#allocation7 + $0x10] sm:$0xff]
        %v282 = vld [vmem:[#allocation7 + $0x18] sm:$0xff]
        %v283 = vld [vmem:[#allocation7 + $0x20] sm:$0xff]
        %v284 = vld [vmem:[#allocation7 + $0x28] sm:$0xff]
        %v285 = vld [vmem:[#allocation7 + $0x30] sm:$0xff]
        %v286 = vld [vmem:[#allocation7 + $0x38] sm:$0xff]
        %v287 = vld [vmem:[#allocation7 + $0x40] sm:$0xff]
        %v288 = vld [vmem:[#allocation7 + $0x48] sm:$0xff]
        %v289 = vld [vmem:[#allocation7 + $0x50] sm:$0xff]
        %v290 = vld [vmem:[#allocation7 + $0x58] sm:$0xff]
        %v291 = vld [vmem:[#allocation7 + $0x60] sm:$0xff]
        %v292 = vld [vmem:[#allocation7 + $0x68] sm:$0xff]
        %v293 = vld [vmem:[#allocation7 + $0x70] sm:$0xff]
        %v294 = vld [vmem:[#allocation7 + $0x78] sm:$0xff]
        %v295 = vlaneseq
        %v296 = vshrl.u32 %v295, 7
        %v297 = vsub.s32 0, %v296
        %v298 = vrot.slane %v223, %v297
        %299 = vmatprep.subr.mxu0 0.0
        %300 = vmatpush1.msra.mxu0 %v294
        %301 = vmatprep.subr.mxu0 0.0
        %302 = vmatpush1.msra.mxu0 %v293
        %303 = vmatprep.subr.mxu0 0.0
        %304 = vmatpush1.msra.mxu0 %v292
        %305 = vmatprep.subr.mxu0 0.0
        %306 = vmatpush1.msra.mxu0 %v291
        %307 = vmatprep.subr.mxu0 0.0
        %308 = vmatpush1.msra.mxu0 %v290
        %309 = vmatprep.subr.mxu0 0.0
        %310 = vmatpush1.msra.mxu0 %v289
        %311 = vmatprep.subr.mxu0 0.0
        %312 = vmatpush1.msra.mxu0 %v288
        %313 = vmatprep.subr.mxu0 0.0
        %314 = vmatpush1.msra.mxu0 %v287
        %315 = vmatprep.subr.mxu0 0.0
        %316 = vmatpush1.msra.mxu0 %v286
        %317 = vmatprep.subr.mxu0 0.0
        %318 = vmatpush1.msra.mxu0 %v285
        %319 = vmatprep.subr.mxu0 0.0
        %320 = vmatpush1.msra.mxu0 %v284
        %321 = vmatprep.subr.mxu0 0.0
        %322 = vmatpush1.msra.mxu0 %v283
        %323 = vmatprep.subr.mxu0 0.0
        %324 = vmatpush1.msra.mxu0 %v282
        %325 = vmatprep.subr.mxu0 0.0
        %326 = vmatpush1.msra.mxu0 %v281
        %327 = vmatprep.subr.mxu0 0.0
        %328 = vmatpush1.msra.mxu0 %v280
        %329 = vmatprep.subr.mxu0 0.0
        %330 = vmatpush1.msra.mxu0 %v279
        %331 = vmatprep.subr.mxu0 0.0
        %332 = vmatpush2.msra.mxu0 0.0
        %333 = vmatprep.subr.mxu0 0.0
        %334 = vmatpush2.msra.mxu0 0.0
        %335 = vmatprep.subr.mxu0 0.0
        %336 = vmatpush2.msra.mxu0 0.0
        %337 = vmatprep.subr.mxu0 0.0
        %338 = vmatpush2.msra.mxu0 0.0
        %339 = vmatprep.subr.mxu0 0.0
        %340 = vmatpush2.msra.mxu0 0.0
        %341 = vmatprep.subr.mxu0 0.0
        %342 = vmatpush2.msra.mxu0 0.0
        %343 = vmatprep.subr.mxu0 0.0
        %344 = vmatpush2.msra.mxu0 0.0
        %345 = vmatprep.subr.mxu0 0.0
        %346 = vmatpush2.msra.mxu0 0.0
        %347 = vmatprep.subr.mxu0 0.0
        %348 = vmatpush2.msra.mxu0 0.0
        %349 = vmatprep.subr.mxu0 0.0
        %350 = vmatpush2.msra.mxu0 0.0
        %351 = vmatprep.subr.mxu0 0.0
        %352 = vmatpush2.msra.mxu0 0.0
        %353 = vmatprep.subr.mxu0 0.0
        %354 = vmatpush2.msra.mxu0 0.0
        %355 = vmatprep.subr.mxu0 0.0
        %356 = vmatpush2.msra.mxu0 0.0
        %357 = vmatprep.subr.mxu0 0.0
        %358 = vmatpush2.msra.mxu0 0.0
        %359 = vmatprep.subr.mxu0 0.0
        %360 = vmatpush2.msra.mxu0 0.0
        %361 = vmatprep.subr.mxu0 0.0
        %362 = vmatpush2.msra.mxu0 0.0
        %363 = vmatprep.mubr.f32.mxu0 0.0
        %364 = vmatmul.mubr.f32.gmra.mxu0 %v276
        %v365 = vpop.f32.mrf.mxu0
        %v366 = vadd.f32 %v298, %v365
        %v367 = vpop.f32.mrf.mxu0
        %368 = vmatprep.mubr.f32.mxu0 0.0
        %369 = vmatmul.mubr.f32.gmra.mxu0 %v277
        %v370 = vpop.f32.mrf.mxu0
        %v371 = vadd.f32 %v298, %v370
        %v372 = vpop.f32.mrf.mxu0
        %373 = vmatprep.mubr.f32.mxu0 0.0
        %374 = vmatmul.mubr.f32.gmra.mxu0 %v278
        %v375 = vpop.f32.mrf.mxu0
        %v376 = vadd.f32 %v298, %v375
        %v377 = vpop.f32.mrf.mxu0
        %378 = vdwg.mxu0
        %379 = vadd.xlane.f32.xlu0 %v366
        %v380 = vpop.xlane.xlu0 %379
        %381 = vadd.xlane.f32.xlu0 %v371
        %v382 = vpop.xlane.xlu0 %381
        %383 = vadd.xlane.f32.xlu0 %v376
        %v384 = vpop.xlane.xlu0 %383
        %v385 = vmul.f32 %v366, %v366
        %v386 = vmul.f32 %v371, %v371
        %v387 = vmul.f32 %v376, %v376
        %388 = vadd.xlane.f32.xlu0 %v385
        %v389 = vpop.xlane.xlu0 %388
        %390 = vadd.xlane.f32.xlu0 %v386
        %v391 = vpop.xlane.xlu0 %390
        %392 = vadd.xlane.f32.xlu0 %v387
        %v393 = vpop.xlane.xlu0 %392
        %v394 = vmul.f32 %v380, 0.03125
        %v395 = vmul.f32 %v382, 0.03125
        %v396 = vmul.f32 %v384, 0.03125
        %v397 = vmul.f32 %v389, 0.03125
        %v398 = vmul.f32 %v391, 0.03125
        %v399 = vmul.f32 %v393, 0.03125
        %v400 = vmul.f32 %v394, %v394
        %v401 = vmul.f32 %v395, %v395
        %v402 = vmul.f32 %v396, %v396
        %v403 = vsub.f32 %v397, %v400
        %v404 = vsub.f32 %v398, %v401
        %v405 = vsub.f32 %v399, %v402
        %v406 = vsub.f32 %v366, %v394
        %v407 = vsub.f32 %v371, %v395
        %v408 = vsub.f32 %v376, %v396
        %v409 = vadd.f32 %v403, 1e-05
        %v410 = vadd.f32 %v404, 1e-05
        %v411 = vadd.f32 %v405, 1e-05
        %v412 = vrsqrt.pop %v409
        %v413 = vrsqrt.pop %v410
        %v414 = vrsqrt.pop %v411
        %v415 = vmul.f32 %v406, %v412
        %v416 = vmul.f32 %v407, %v413
        %v417 = vmul.f32 %v408, %v414
        %v418 = vlaneseq
        %v419 = vshrl.u32 %v418, 7
        %v420 = vsub.s32 0, %v419
        %v421 = vrot.slane %v224, %v420
        %v422 = vmul.f32 %v415, %v421
        %v423 = vmul.f32 %v416, %v421
        %v424 = vmul.f32 %v417, %v421
        %v425 = vlaneseq
        %v426 = vshrl.u32 %v425, 7
        %v427 = vsub.s32 0, %v426
        %v428 = vrot.slane %v225, %v427
        %v429 = vadd.f32 %v422, %v428
        %v430 = vadd.f32 %v423, %v428
        %v431 = vadd.f32 %v424, %v428
        %432 = vst [vmem:[%s215] sm:$0xff] %v429
        %433 = vst [vmem:[%s215 + $0x8] sm:$0xff] %v430
        %434 = vst [vmem:[%s215 + $0x10] sm:$0xff] %v431
        %s435 = sand.u32 %s97, 1
        %s436 = scalar_lea.sflag [#allocation4], %s435
        %s437 = sand.u32 %s97, 1
        %s438 = smul.addr %s437, 24
        %s439 = scalar_lea.vmem [#allocation8], %s438
        // Predicated region
        $region45: #{tpu_custom_call.1} parent=31 // pred_check
          %p440 = pneg %p107
        $region46: #{tpu_custom_call.1} parent=31 // pred_check_branch
          %442 = sbr.rel (%p440) target = $region48
        $region47: #{tpu_custom_call.1} parent=31 // pred_region
          %s443 = smul.u32 3, %s21
          %s445 = ssub.s32 384, 384
          %446 = vsyncadd %s436, %s445
          %s447 = smul.addr %s443, 128
          %s448 = scalar_lea.hbm %s3, %s447
          %s449 = sshll.u32 %s439, 4
          %s450 = int_to_ptr.vmem [resolvable:$true] %s449
          %455 = dma.vmem_to_hbm [thread:$0]  %s450, 384, %s448, %s436, 128, 128, 8
        $region48: #{tpu_custom_call.1} parent=31 // pred_fallthru
          _
      $region32: #{tpu_custom_call.1} parent=5 // pred_fallthru
        _
      %p456 = scmp.le.s32.totalorder 2, %s16
      // Predicated region
      $region49: #{tpu_custom_call.1} parent=5 // pred_check
        %p457 = pneg %p456
      $region50: #{tpu_custom_call.1} parent=5 // pred_check_branch
        %459 = sbr.rel (%p457) target = $region52
      $region51: #{tpu_custom_call.1} parent=5 // pred_region
        %s460 = ssub.s32 %s16, 2
        // Predicated region
        $region53: #{tpu_custom_call.1} parent=51 // pred_check
          %p461 = pneg %p113
        $region54: #{tpu_custom_call.1} parent=51 // pred_check_branch
          %463 = sbr.rel (%p461) target = $region56
        $region55: #{tpu_custom_call.1} parent=51 // pred_region
          %s464 = sand.u32 %s98, 1
          %s465 = scalar_lea.sflag [#allocation4], %s464
          %s466 = sand.u32 %s98, 1
          %s467 = smul.addr %s466, 24
          %s468 = scalar_lea.vmem [#allocation8], %s467
          %469 = dma.done %s465, 384
        $region56: #{tpu_custom_call.1} parent=51 // pred_fallthru
          _
      $region52: #{tpu_custom_call.1} parent=5 // pred_fallthru
        _
    $region6: #{tpu_custom_call.1} parent=1 // loop_footer
      %s20 = sadd.s32 1, %s16
    $region7: #{tpu_custom_call.1} parent=1 // loop_footer_branch
      %15 = sbr.rel target = $region3
    $region8: #{tpu_custom_call.1} parent=1 // loop_exit
      _
    %470 = vsyncpa [#allocation3], 1
    %s471 = scalar_lea.sflag [#allocation3], 1
    %472 = vsyncpa %s471, 1
    %473 = vsyncpa [#allocation6], 1
    %474 = vsyncpa [#allocation4], 1
    %s475 = scalar_lea.sflag [#allocation4], 1
    %476 = vsyncpa %s475, 1

// kernel: tpu_custom_call.1
$region0: #{tpu_custom_call.1}
  #allocation0 [shape = 'u32[]', space=smem, size = 0x4, offset = 0x4, fixed_abs, tag = 'smem constant byte address 0x4 - core index']
  #allocation1 [shape = 'u32[144,128]{1,0:T(1,128)}', space=vmem, size = 0x12000, scoped, tag = 'internal scratch']
  %s0 = inlined_call_operand.hbm [shape: f32[48,128], index: 0, kind: input, shape index: {}]
  %s1 = inlined_call_operand.hbm [shape: f32[8,128], index: 1, kind: input, shape index: {}]
  %s2 = inlined_call_operand.hbm [shape: f32[128,128], index: 2, kind: input, shape index: {}]
  %s3 = inlined_call_operand.hbm [shape: f32[48,128], index: 3, kind: output, shape index: {}]
  %s4 = sld [smem:[#allocation0]]
  $region57: #{tpu_custom_call.1} parent=0
    _
  %s6 = ssub.s32 1, %s4
  %s7 = scalar_select 0, %s6, %s4
  $region1: #{tpu_custom_call.1} parent=0
    #allocation2 [shape = 'u8[24576]{0}', space=vmem, size = 0x6000, scoped, tag = 'input window, operand 0']
    #allocation3 [shape = 's32[2]{0}', space=sflag, size = 0x8, scoped, tag = 'scoped memory for tpu_custom_call.1']
    #allocation4 [shape = 's32[2]{0}', space=sflag, size = 0x8, scoped, tag = 'scoped memory for tpu_custom_call.1']
    #allocation5 [shape = 'u8[4096]{0}', space=vmem, size = 0x1000, scoped, tag = 'input window, operand 1, single buffered']
    #allocation6 [shape = 's32[1]{0}', space=sflag, size = 0x4, scoped, tag = 'scoped memory for tpu_custom_call.1']
    #allocation7 [shape = 'u8[65536]{0}', space=vmem, size = 0x10000, scoped, tag = 'input window, operand 2, single buffered']
    #allocation8 [shape = 'u8[24576]{0}', space=vmem, size = 0x6000, scoped, tag = 'output window, operand 0']
    %8 = vsyncpa [#allocation3], 0
    %s9 = scalar_lea.sflag [#allocation3], 1
    %10 = vsyncpa %s9, 0
    %11 = vsyncpa [#allocation6], 0
    %12 = vsyncpa [#allocation4], 0
    %s13 = scalar_lea.sflag [#allocation4], 1
    %14 = vsyncpa %s13, 0
    loop: start=0, step=1, limit=4
    $region2: #{tpu_custom_call.1} parent=1 // loop_pre_header
      _
    $region3: #{tpu_custom_call.1} parent=1 // loop_header
      %s16 = sphi 0, %s20
      %p17 = scmp.ge.s32.totalorder %s16, 4
      %s26 = sphi 0, %s28
      %s29 = sphi 0, %s26
      %s30 = sphi 0, %s29
      %s46 = sphi 0, %s30
      %s50 = sphi 0, %s50
      %s52 = sphi 0, %s50
      %s53 = sphi 0, %s52
      %s67 = sphi 0, %s53
      %s71 = sphi 0, %s71
      %s73 = sphi 0, %s71
      %s74 = sphi 0, %s73
      %s88 = sphi 0, %s74
      %s94 = sphi 0, %s96
      %s97 = sphi 0, %s94
      %s98 = sphi 0, %s97
      %s114 = sphi 0, %s98
    $region4: #{tpu_custom_call.1} parent=1 // loop_header_branch
      %19 = sbr.rel (%p17) target = $region8
    $region5: #{tpu_custom_call.1} parent=1 // loop_body
      %s21 = ssub.s32 %s16, 1
      %s22 = ssub.s32 %s16, 2
      %s23 = sadd.s32 %s16, 1
      %s24 = ssub.s32 %s16, %s23
      %p25 = scmp.eq.s32.totalorder %s24, 0
      %s27 = sadd.s32 %s26, 1
      %s28 = scalar_select %p25, %s26, %s27
      %p31 = pneg %p25
      %p32 = scmp.eq.s32.totalorder %s16, 1
      %p33 = por %p31, %p32
      %p34 = scmp.ne.s32.totalorder %s26, %s29
      %p35 = scmp.eq.s32.totalorder %s16, 0
      %p36 = por %p34, %p35
      %p37 = scmp.ne.s32.totalorder %s26, %s29
      %p38 = scmp.eq.s32.totalorder %s21, 1
      %p39 = por %p37, %p38
      %p40 = scmp.ne.s32.totalorder %s29, %s30
      %p41 = scmp.eq.s32.totalorder %s21, 0
      %p42 = por %p40, %p41
      %p43 = scmp.ne.s32.totalorder %s29, %s30
      %p44 = scmp.eq.s32.totalorder %s22, 1
      %p45 = por %p43, %p44
      %p47 = scmp.ne.s32.totalorder %s30, %s46
      %p48 = scmp.eq.s32.totalorder %s22, 0
      %p49 = por %p47, %p48
      %s51 = sadd.s32 %s50, 1
      %p54 = scmp.eq.s32.totalorder %s16, 1
      %p55 = scmp.ne.s32.totalorder %s50, %s52
      %p56 = scmp.eq.s32.totalorder %s16, 0
      %p57 = por %p55, %p56
      %p58 = scmp.ne.s32.totalorder %s50, %s52
      %p59 = scmp.eq.s32.totalorder %s21, 1
      %p60 = por %p58, %p59
      %p61 = scmp.ne.s32.totalorder %s52, %s53
      %p62 = scmp.eq.s32.totalorder %s21, 0
      %p63 = por %p61, %p62
      %p64 = scmp.ne.s32.totalorder %s52, %s53
      %p65 = scmp.eq.s32.totalorder %s22, 1
      %p66 = por %p64, %p65
      %p68 = scmp.ne.s32.totalorder %s53, %s67
      %p69 = scmp.eq.s32.totalorder %s22, 0
      %p70 = por %p68, %p69
      %s72 = sadd.s32 %s71, 1
      %p75 = scmp.eq.s32.totalorder %s16, 1
      %p76 = scmp.ne.s32.totalorder %s71, %s73
      %p77 = scmp.eq.s32.totalorder %s16, 0
      %p78 = por %p76, %p77
      %p79 = scmp.ne.s32.totalorder %s71, %s73
      %p80 = scmp.eq.s32.totalorder %s21, 1
      %p81 = por %p79, %p80
      %p82 = scmp.ne.s32.totalorder %s73, %s74
      %p83 = scmp.eq.s32.totalorder %s21, 0
      %p84 = por %p82, %p83
      %p85 = scmp.ne.s32.totalorder %s73, %s74
      %p86 = scmp.eq.s32.totalorder %s22, 1
      %p87 = por %p85, %p86
      %p89 = scmp.ne.s32.totalorder %s74, %s88
      %p90 = scmp.eq.s32.totalorder %s22, 0
      %p91 = por %p89, %p90
      %s92 = ssub.s32 %s16, %s23
      %p93 = scmp.eq.s32.totalorder %s92, 0
      %s95 = sadd.s32 %s94, 1
      %s96 = scalar_select %p93, %s94, %s95
      %p99 = pneg %p93
      %p100 = scmp.eq.s32.totalorder %s16, 1
      %p101 = por %p99, %p100
      %p102 = scmp.ne.s32.totalorder %s94, %s97
      %p103 = scmp.eq.s32.totalorder %s16, 0
      %p104 = por %p102, %p103
      %p105 = scmp.ne.s32.totalorder %s94, %s97
      %p106 = scmp.eq.s32.totalorder %s21, 1
      %p107 = por %p105, %p106
      %p108 = scmp.ne.s32.totalorder %s97, %s98
      %p109 = scmp.eq.s32.totalorder %s21, 0
      %p110 = por %p108, %p109
      %p111 = scmp.ne.s32.totalorder %s97, %s98
      %p112 = scmp.eq.s32.totalorder %s22, 1
      %p113 = por %p111, %p112
      %p115 = scmp.ne.s32.totalorder %s98, %s114
      %p116 = scmp.eq.s32.totalorder %s22, 0
      %p117 = por %p115, %p116
      %p118 = scmp.le.s32.totalorder 1, %s16
      %p119 = scmp.lt.s32.totalorder %s16, 3
      %p120 = pnand %p118, %p119
      %p121 = pneg %p120
      // Predicated region
      $region9: #{tpu_custom_call.1} parent=5 // pred_check
        _
      $region10: #{tpu_custom_call.1} parent=5 // pred_check_branch
        %123 = sbr.rel (%p120) target = $region12
      $region11: #{tpu_custom_call.1} parent=5 // pred_region
        %s124 = ssub.s32 %s16, 1
        // Predicated region
        $region13: #{tpu_custom_call.1} parent=11 // pred_check
          %p125 = pneg %p63
        $region14: #{tpu_custom_call.1} parent=11 // pred_check_branch
          %127 = sbr.rel (%p125) target = $region16
        $region15: #{tpu_custom_call.1} parent=11 // pred_region
          %s129 = ssub.s32 128, 128
          %130 = vsyncadd [#allocation6], %s129
          %s132 = sshll.u32 [#allocation5], 4
          %s133 = int_to_ptr.vmem [resolvable:$true] %s132
          %135 = dma.hbm_to_vmem [thread:$0]  %s1, 128, %s133, [#allocation6]
        $region16: #{tpu_custom_call.1} parent=11 // pred_fallthru
          _
        // Predicated region
        $region17: #{tpu_custom_call.1} parent=11 // pred_check
          %p136 = pneg %p84
        $region18: #{tpu_custom_call.1} parent=11 // pred_check_branch
          %138 = sbr.rel (%p136) target = $region20
        $region19: #{tpu_custom_call.1} parent=11 // pred_region
          %s140 = ssub.s32 2048, 2048
          %141 = vsyncadd [#allocation6], %s140
          %s142 = sshll.u32 [#allocation7], 4
          %s143 = int_to_ptr.vmem [resolvable:$true] %s142
          %148 = dma.hbm_to_vmem [thread:$0]  %s2, 2048, %s143, [#allocation6], 128, 128, 8
        $region20: #{tpu_custom_call.1} parent=11 // pred_fallthru
          _
      $region12: #{tpu_custom_call.1} parent=5 // pred_fallthru
        _
      %p149 = scmp.lt.s32.totalorder %s16, 2
      // Predicated region
      $region21: #{tpu_custom_call.1} parent=5 // pred_check
        %p150 = pneg %p149
      $region22: #{tpu_custom_call.1} parent=5 // pred_check_branch
        %152 = sbr.rel (%p150) target = $region24
      $region23: #{tpu_custom_call.1} parent=5 // pred_region
        // Predicated region
        $region25: #{tpu_custom_call.1} parent=23 // pred_check
          %p153 = pneg %p36
        $region26: #{tpu_custom_call.1} parent=23 // pred_check_branch
          %155 = sbr.rel (%p153) target = $region28
        $region27: #{tpu_custom_call.1} parent=23 // pred_region
          %s156 = sand.u32 %s26, 1
          %s157 = scalar_lea.sflag [#allocation3], %s156
          %s158 = sand.u32 %s26, 1
          %s159 = smul.addr %s158, 24
          %s160 = scalar_lea.vmem [#allocation2], %s159
          %s161 = smul.u32 3, %s16
          %s163 = ssub.s32 384, 384
          %164 = vsyncadd %s157, %s163
          %s165 = smul.addr %s161, 128
          %s166 = scalar_lea.hbm %s0, %s165
          %s167 = sshll.u32 %s160, 4
          %s168 = int_to_ptr.vmem [resolvable:$true] %s167
          %173 = dma.hbm_to_vmem [thread:$0]  %s166, 384, %s168, %s157, 128, 128, 8
        $region28: #{tpu_custom_call.1} parent=23 // pred_fallthru
          _
      $region24: #{tpu_custom_call.1} parent=5 // pred_fallthru
        _
      %p174 = scmp.le.s32.totalorder 1, %s16
      %p175 = scmp.lt.s32.totalorder %s16, 3
      %p176 = pnand %p174, %p175
      %p177 = pneg %p176
      // Predicated region
      $region29: #{tpu_custom_call.1} parent=5 // pred_check
        _
      $region30: #{tpu_custom_call.1} parent=5 // pred_check_branch
        %179 = sbr.rel (%p176) target = $region32
      $region31: #{tpu_custom_call.1} parent=5 // pred_region
        %s180 = ssub.s32 %s16, 1
        %s181 = sand.u32 %s29, 1
        %s182 = scalar_lea.sflag [#allocation3], %s181
        %s183 = sand.u32 %s29, 1
        %s184 = smul.addr %s183, 24
        %s185 = scalar_lea.vmem [#allocation2], %s184
        // Predicated region
        $region33: #{tpu_custom_call.1} parent=31 // pred_check
          %p186 = pneg %p42
        $region34: #{tpu_custom_call.1} parent=31 // pred_check_branch
          %188 = sbr.rel (%p186) target = $region36
        $region35: #{tpu_custom_call.1} parent=31 // pred_region
          %189 = dma.done %s182, 384
        $region36: #{tpu_custom_call.1} parent=31 // pred_fallthru
          _
        // Predicated region
        $region37: #{tpu_custom_call.1} parent=31 // pred_check
          %p190 = pneg %p63
        $region38: #{tpu_custom_call.1} parent=31 // pred_check_branch
          %192 = sbr.rel (%p190) target = $region40
        $region39: #{tpu_custom_call.1} parent=31 // pred_region
          %193 = dma.done [#allocation6], 128
        $region40: #{tpu_custom_call.1} parent=31 // pred_fallthru
          _
        // Predicated region
        $region41: #{tpu_custom_call.1} parent=31 // pred_check
          %p194 = pneg %p84
        $region42: #{tpu_custom_call.1} parent=31 // pred_check_branch
          %196 = sbr.rel (%p194) target = $region44
        $region43: #{tpu_custom_call.1} parent=31 // pred_region
          %197 = dma.done [#allocation6], 2048
        $region44: #{tpu_custom_call.1} parent=31 // pred_fallthru
          _
        %s198 = sand.u32 %s29, 1
        %s199 = scalar_lea.sflag [#allocation3], %s198
        %s200 = sand.u32 %s29, 1
        %s201 = smul.addr %s200, 24
        %s202 = scalar_lea.vmem [#allocation2], %s201
        %p203 = pneg %p42
        %p204 = pneg %p39
        %p205 = pneg %p63
        %p206 = pneg %p60
        %p207 = pneg %p84
        %p208 = pneg %p81
        %p209 = pneg %p110
        %p210 = pneg %p107
        %s211 = sand.u32 %s97, 1
        %s212 = scalar_lea.sflag [#allocation4], %s211
        %s213 = sand.u32 %s97, 1
        %s214 = smul.addr %s213, 24
        %s215 = scalar_lea.vmem [#allocation8], %s214
        %s216 = smul.u32 3, %s21
        %s217 = smul.u32 3, %s21
        %v218 = vld [vmem:[%s185] sm:$0xff]
        %v219 = vld [vmem:[%s185 + $0x8] sm:$0xff]
        %v220 = vld [vmem:[%s185 + $0x10] sm:$0xff]
        %v221 = vld [vmem:[#allocation5] sm:$0x1]
        %v222 = vld [vmem:[#allocation5 + $0x1] sm:$0x1]
        %v223 = vld [vmem:[#allocation5 + $0x2] sm:$0x1]
        %v224 = vld [vmem:[#allocation5 + $0x3] sm:$0x1]
        %v225 = vld [vmem:[#allocation5 + $0x4] sm:$0x1]
        %226 = vadd.xlane.f32.xlu0 %v218
        %v227 = vpop.xlane.xlu0 %226
        %228 = vadd.xlane.f32.xlu0 %v219
        %v229 = vpop.xlane.xlu0 %228
        %230 = vadd.xlane.f32.xlu0 %v220
        %v231 = vpop.xlane.xlu0 %230
        %v232 = vmul.f32 %v218, %v218
        %v233 = vmul.f32 %v219, %v219
        %v234 = vmul.f32 %v220, %v220
        %235 = vadd.xlane.f32.xlu0 %v232
        %v236 = vpop.xlane.xlu0 %235
        %237 = vadd.xlane.f32.xlu0 %v233
        %v238 = vpop.xlane.xlu0 %237
        %239 = vadd.xlane.f32.xlu0 %v234
        %v240 = vpop.xlane.xlu0 %239
        %v241 = vmul.f32 %v227, 0.03125
        %v242 = vmul.f32 %v229, 0.03125
        %v243 = vmul.f32 %v231, 0.03125
        %v244 = vmul.f32 %v236, 0.03125
        %v245 = vmul.f32 %v238, 0.03125
        %v246 = vmul.f32 %v240, 0.03125
        %v247 = vmul.f32 %v241, %v241
        %v248 = vmul.f32 %v242, %v242
        %v249 = vmul.f32 %v243, %v243
        %v250 = vsub.f32 %v244, %v247
        %v251 = vsub.f32 %v245, %v248
        %v252 = vsub.f32 %v246, %v249
        %v253 = vsub.f32 %v218, %v241
        %v254 = vsub.f32 %v219, %v242
        %v255 = vsub.f32 %v220, %v243
        %v256 = vadd.f32 %v250, 1e-05
        %v257 = vadd.f32 %v251, 1e-05
        %v258 = vadd.f32 %v252, 1e-05
        %v259 = vrsqrt.pop %v256
        %v260 = vrsqrt.pop %v257
        %v261 = vrsqrt.pop %v258
        %v262 = vmul.f32 %v253, %v259
        %v263 = vmul.f32 %v254, %v260
        %v264 = vmul.f32 %v255, %v261
        %v265 = vlaneseq
        %v266 = vshrl.u32 %v265, 7
        %v267 = vsub.s32 0, %v266
        %v268 = vrot.slane %v221, %v267
        %v269 = vmul.f32 %v262, %v268
        %v270 = vmul.f32 %v263, %v268
        %v271 = vmul.f32 %v264, %v268
        %v272 = vlaneseq
        %v273 = vshrl.u32 %v272, 7
        %v274 = vsub.s32 0, %v273
        %v275 = vrot.slane %v222, %v274
        %v276 = vadd.f32 %v269, %v275
        %v277 = vadd.f32 %v270, %v275
        %v278 = vadd.f32 %v271, %v275
        %v279 = vld [vmem:[#allocation7] sm:$0xff]
        %v280 = vld [vmem:[#allocation7 + $0x8] sm:$0xff]
        %v281 = vld [vmem:[#allocation7 + $0x10] sm:$0xff]
        %v282 = vld [vmem:[#allocation7 + $0x18] sm:$0xff]
        %v283 = vld [vmem:[#allocation7 + $0x20] sm:$0xff]
        %v284 = vld [vmem:[#allocation7 + $0x28] sm:$0xff]
        %v285 = vld [vmem:[#allocation7 + $0x30] sm:$0xff]
        %v286 = vld [vmem:[#allocation7 + $0x38] sm:$0xff]
        %v287 = vld [vmem:[#allocation7 + $0x40] sm:$0xff]
        %v288 = vld [vmem:[#allocation7 + $0x48] sm:$0xff]
        %v289 = vld [vmem:[#allocation7 + $0x50] sm:$0xff]
        %v290 = vld [vmem:[#allocation7 + $0x58] sm:$0xff]
        %v291 = vld [vmem:[#allocation7 + $0x60] sm:$0xff]
        %v292 = vld [vmem:[#allocation7 + $0x68] sm:$0xff]
        %v293 = vld [vmem:[#allocation7 + $0x70] sm:$0xff]
        %v294 = vld [vmem:[#allocation7 + $0x78] sm:$0xff]
        %v295 = vlaneseq
        %v296 = vshrl.u32 %v295, 7
        %v297 = vsub.s32 0, %v296
        %v298 = vrot.slane %v223, %v297
        %299 = vmatprep.subr.mxu0 0.0
        %300 = vmatpush1.msra.mxu0 %v294
        %301 = vmatprep.subr.mxu0 0.0
        %302 = vmatpush1.msra.mxu0 %v293
        %303 = vmatprep.subr.mxu0 0.0
        %304 = vmatpush1.msra.mxu0 %v292
        %305 = vmatprep.subr.mxu0 0.0
        %306 = vmatpush1.msra.mxu0 %v291
        %307 = vmatprep.subr.mxu0 0.0
        %308 = vmatpush1.msra.mxu0 %v290
        %309 = vmatprep.subr.mxu0 0.0
        %310 = vmatpush1.msra.mxu0 %v289
        %311 = vmatprep.subr.mxu0 0.0
        %312 = vmatpush1.msra.mxu0 %v288
        %313 = vmatprep.subr.mxu0 0.0
        %314 = vmatpush1.msra.mxu0 %v287
        %315 = vmatprep.subr.mxu0 0.0
        %316 = vmatpush1.msra.mxu0 %v286
        %317 = vmatprep.subr.mxu0 0.0
        %318 = vmatpush1.msra.mxu0 %v285
        %319 = vmatprep.subr.mxu0 0.0
        %320 = vmatpush1.msra.mxu0 %v284
        %321 = vmatprep.subr.mxu0 0.0
        %322 = vmatpush1.msra.mxu0 %v283
        %323 = vmatprep.subr.mxu0 0.0
        %324 = vmatpush1.msra.mxu0 %v282
        %325 = vmatprep.subr.mxu0 0.0
        %326 = vmatpush1.msra.mxu0 %v281
        %327 = vmatprep.subr.mxu0 0.0
        %328 = vmatpush1.msra.mxu0 %v280
        %329 = vmatprep.subr.mxu0 0.0
        %330 = vmatpush1.msra.mxu0 %v279
        %331 = vmatprep.subr.mxu0 0.0
        %332 = vmatpush2.msra.mxu0 0.0
        %333 = vmatprep.subr.mxu0 0.0
        %334 = vmatpush2.msra.mxu0 0.0
        %335 = vmatprep.subr.mxu0 0.0
        %336 = vmatpush2.msra.mxu0 0.0
        %337 = vmatprep.subr.mxu0 0.0
        %338 = vmatpush2.msra.mxu0 0.0
        %339 = vmatprep.subr.mxu0 0.0
        %340 = vmatpush2.msra.mxu0 0.0
        %341 = vmatprep.subr.mxu0 0.0
        %342 = vmatpush2.msra.mxu0 0.0
        %343 = vmatprep.subr.mxu0 0.0
        %344 = vmatpush2.msra.mxu0 0.0
        %345 = vmatprep.subr.mxu0 0.0
        %346 = vmatpush2.msra.mxu0 0.0
        %347 = vmatprep.subr.mxu0 0.0
        %348 = vmatpush2.msra.mxu0 0.0
        %349 = vmatprep.subr.mxu0 0.0
        %350 = vmatpush2.msra.mxu0 0.0
        %351 = vmatprep.subr.mxu0 0.0
        %352 = vmatpush2.msra.mxu0 0.0
        %353 = vmatprep.subr.mxu0 0.0
        %354 = vmatpush2.msra.mxu0 0.0
        %355 = vmatprep.subr.mxu0 0.0
        %356 = vmatpush2.msra.mxu0 0.0
        %357 = vmatprep.subr.mxu0 0.0
        %358 = vmatpush2.msra.mxu0 0.0
        %359 = vmatprep.subr.mxu0 0.0
        %360 = vmatpush2.msra.mxu0 0.0
        %361 = vmatprep.subr.mxu0 0.0
        %362 = vmatpush2.msra.mxu0 0.0
        %363 = vmatprep.mubr.f32.mxu0 0.0
        %364 = vmatmul.mubr.f32.gmra.mxu0 %v276
        %v365 = vpop.f32.mrf.mxu0
        %v366 = vadd.f32 %v298, %v365
        %v367 = vpop.f32.mrf.mxu0
        %368 = vmatprep.mubr.f32.mxu0 0.0
        %369 = vmatmul.mubr.f32.gmra.mxu0 %v277
        %v370 = vpop.f32.mrf.mxu0
        %v371 = vadd.f32 %v298, %v370
        %v372 = vpop.f32.mrf.mxu0
        %373 = vmatprep.mubr.f32.mxu0 0.0
        %374 = vmatmul.mubr.f32.gmra.mxu0 %v278
        %v375 = vpop.f32.mrf.mxu0
        %v376 = vadd.f32 %v298, %v375
        %v377 = vpop.f32.mrf.mxu0
        %378 = vdwg.mxu0
        %379 = vadd.xlane.f32.xlu0 %v366
        %v380 = vpop.xlane.xlu0 %379
        %381 = vadd.xlane.f32.xlu0 %v371
        %v382 = vpop.xlane.xlu0 %381
        %383 = vadd.xlane.f32.xlu0 %v376
        %v384 = vpop.xlane.xlu0 %383
        %v385 = vmul.f32 %v366, %v366
        %v386 = vmul.f32 %v371, %v371
        %v387 = vmul.f32 %v376, %v376
        %388 = vadd.xlane.f32.xlu0 %v385
        %v389 = vpop.xlane.xlu0 %388
        %390 = vadd.xlane.f32.xlu0 %v386
        %v391 = vpop.xlane.xlu0 %390
        %392 = vadd.xlane.f32.xlu0 %v387
        %v393 = vpop.xlane.xlu0 %392
        %v394 = vmul.f32 %v380, 0.03125
        %v395 = vmul.f32 %v382, 0.03125
        %v396 = vmul.f32 %v384, 0.03125
        %v397 = vmul.f32 %v389, 0.03125
        %v398 = vmul.f32 %v391, 0.03125
        %v399 = vmul.f32 %v393, 0.03125
        %v400 = vmul.f32 %v394, %v394
        %v401 = vmul.f32 %v395, %v395
        %v402 = vmul.f32 %v396, %v396
        %v403 = vsub.f32 %v397, %v400
        %v404 = vsub.f32 %v398, %v401
        %v405 = vsub.f32 %v399, %v402
        %v406 = vsub.f32 %v366, %v394
        %v407 = vsub.f32 %v371, %v395
        %v408 = vsub.f32 %v376, %v396
        %v409 = vadd.f32 %v403, 1e-05
        %v410 = vadd.f32 %v404, 1e-05
        %v411 = vadd.f32 %v405, 1e-05
        %v412 = vrsqrt.pop %v409
        %v413 = vrsqrt.pop %v410
        %v414 = vrsqrt.pop %v411
        %v415 = vmul.f32 %v406, %v412
        %v416 = vmul.f32 %v407, %v413
        %v417 = vmul.f32 %v408, %v414
        %v418 = vlaneseq
        %v419 = vshrl.u32 %v418, 7
        %v420 = vsub.s32 0, %v419
        %v421 = vrot.slane %v224, %v420
        %v422 = vmul.f32 %v415, %v421
        %v423 = vmul.f32 %v416, %v421
        %v424 = vmul.f32 %v417, %v421
        %v425 = vlaneseq
        %v426 = vshrl.u32 %v425, 7
        %v427 = vsub.s32 0, %v426
        %v428 = vrot.slane %v225, %v427
        %v429 = vadd.f32 %v422, %v428
        %v430 = vadd.f32 %v423, %v428
        %v431 = vadd.f32 %v424, %v428
        %432 = vst [vmem:[%s215] sm:$0xff] %v429
        %433 = vst [vmem:[%s215 + $0x8] sm:$0xff] %v430
        %434 = vst [vmem:[%s215 + $0x10] sm:$0xff] %v431
        %s435 = sand.u32 %s97, 1
        %s436 = scalar_lea.sflag [#allocation4], %s435
        %s437 = sand.u32 %s97, 1
        %s438 = smul.addr %s437, 24
        %s439 = scalar_lea.vmem [#allocation8], %s438
        // Predicated region
        $region45: #{tpu_custom_call.1} parent=31 // pred_check
          %p440 = pneg %p107
        $region46: #{tpu_custom_call.1} parent=31 // pred_check_branch
          %442 = sbr.rel (%p440) target = $region48
        $region47: #{tpu_custom_call.1} parent=31 // pred_region
          %s443 = smul.u32 3, %s21
          %s445 = ssub.s32 384, 384
          %446 = vsyncadd %s436, %s445
          %s447 = smul.addr %s443, 128
          %s448 = scalar_lea.hbm %s3, %s447
          %s449 = sshll.u32 %s439, 4
          %s450 = int_to_ptr.vmem [resolvable:$true] %s449
          %455 = dma.vmem_to_hbm [thread:$0]  %s450, 384, %s448, %s436, 128, 128, 8
        $region48: #{tpu_custom_call.1} parent=31 // pred_fallthru
          _
      $region32: #{tpu_custom_call.1} parent=5 // pred_fallthru
        _
      %p456 = scmp.le.s32.totalorder 2, %s16
      // Predicated region
      $region49: #{tpu_custom_call.1} parent=5 // pred_check
        %p457 = pneg %p456
      $region50: #{tpu_custom_call.1} parent=5 // pred_check_branch
        %459 = sbr.rel (%p457) target = $region52
      $region51: #{tpu_custom_call.1} parent=5 // pred_region
        %s460 = ssub.s32 %s16, 2
        // Predicated region
        $region53: #{tpu_custom_call.1} parent=51 // pred_check
          %p461 = pneg %p113
        $region54: #{tpu_custom_call.1} parent=51 // pred_check_branch
          %463 = sbr.rel (%p461) target = $region56
        $region55: #{tpu_custom_call.1} parent=51 // pred_region
          %s464 = sand.u32 %s98, 1
          %s465 = scalar_lea.sflag [#allocation4], %s464
          %s466 = sand.u32 %s98, 1
          %s467 = smul.addr %s466, 24
          %s468 = scalar_lea.vmem [#allocation8], %s467
          %469 = dma.done %s465, 384
        $region56: #{tpu_custom_call.1} parent=51 // pred_fallthru
          _
      $region52: #{tpu_custom_call.1} parent=5 // pred_fallthru
        _
    $region6: #{tpu_custom_call.1} parent=1 // loop_footer
      %s20 = sadd.s32 1, %s16
    $region7: #{tpu_custom_call.1} parent=1 // loop_footer_branch
      %15 = sbr.rel target = $region3
    $region8: #{tpu_custom_call.1} parent=1 // loop_exit
      _
    %470 = vsyncpa [#allocation3], 1
    %s471 = scalar_lea.sflag [#allocation3], 1
    %472 = vsyncpa %s471, 1
    %473 = vsyncpa [#allocation6], 1
    %474 = vsyncpa [#allocation4], 1
    %s475 = scalar_lea.sflag [#allocation4], 1
    %476 = vsyncpa %s475, 1

</llo_original>
